<compile_context>
chip_gen: v7x
topology: tpu7x:2x2x1
jax: 0.10.0
libtpu: 0.0.40
codegen_flags: <defaults>
</compile_context>

<pallas_src>
import functools

import jax
import jax.numpy as jnp
from jax.experimental import pallas as pl
from jax.experimental.pallas import tpu as pltpu


# ---------------------------------------------------------------------------
# Pallas kernel
# ---------------------------------------------------------------------------
def _reward_kernel(dims, n_plan, ag_size,
                   ag_ref, plan_ref, w_ref, b_ref, out_ref):
    """One batch tile of the RewardModel forward pass.

    dims:     tuple of (d_in, d_out) for every layer, in order:
                plan encoder layers, final layers, output head (d_last, 1).
    n_plan:   number of plan-encoder layers.
    ag_size:  achieved_goal feature width (for the split concat-matmul).

    w_ref: bf16 [L, MAX_IN, MAX_OUT]  (head stored transposed as a row)
    b_ref: f32  [L, 1, MAX_OUT]
    """
    f32 = jnp.float32
    bf16 = jnp.bfloat16

    li = 0

    # ---- plan encoding: h = relu(Linear(h)) -------------------------------
    h = plan_ref[...]                                   # f32 activations
    for _ in range(n_plan):
        din, dout = dims[li]
        w = w_ref[li][:din, :dout]                      # bf16, static slice
        b = b_ref[li][:, :dout]                         # f32 [1, dout]
        acc = jnp.dot(h.astype(bf16), w, preferred_element_type=f32) + b
        h = jnp.maximum(acc, 0.0)                       # f32
        li += 1

    # ---- first final layer on cat([achieved_goal, plan_encoding], -1) -----
    # Split matmul over two static row-slices of the same packed weight block
    # (mathematically identical to concat + matmul, no lane concat needed).
    din, dout = dims[li]
    wf0 = w_ref[li]                                     # [MAX_IN, MAX_OUT]
    w_ag = wf0[:ag_size, :dout]
    w_enc = wf0[ag_size:din, :dout]
    b0 = b_ref[li][:, :dout]
    r = (jnp.dot(ag_ref[...].astype(bf16), w_ag, preferred_element_type=f32)
         + jnp.dot(h.astype(bf16), w_enc, preferred_element_type=f32)
         + b0)
    r = jnp.maximum(r, 0.0)                             # f32
    li += 1

    # ---- remaining hidden final layers (ReLU) ------------------------------
    n_hidden_rest = len(dims) - n_plan - 2
    for _ in range(n_hidden_rest):
        din, dout = dims[li]
        w = w_ref[li][:din, :dout]
        b = b_ref[li][:, :dout]
        acc = jnp.dot(r.astype(bf16), w, preferred_element_type=f32) + b
        r = jnp.maximum(acc, 0.0)
        li += 1

    # ---- output head: Linear(d_last -> 1), no activation -------------------
    # Head weight is stored as a [1, d_last] row; a 1-wide MXU matmul would
    # waste a full result tile, so use VPU multiply + XLU lane reduction.
    din, _ = dims[li]
    w_row = w_ref[li][0:1, :din].astype(f32)            # [1, d_last]
    b_head = b_ref[li][:, 0:1]                          # [1, 1]
    out_ref[...] = jnp.sum(r * w_row, axis=-1, keepdims=True) + b_head


# ---------------------------------------------------------------------------
# Wrapper
# ---------------------------------------------------------------------------
def _pick_batch_tile(batch):
    # Batch tiles sized conservatively: widest activation here is <=128 lanes,
    # so even a 256-row f32 tile is ~128 KiB (double-buffered) -- far below
    # v7x's 64 MiB VMEM / 32 MiB default scoped limit.
    for t in (256, 128):
        if batch % t == 0:
            return t
    return batch


def reward_model_forward(achieved_goal, plan, w_packed, b_packed,
                         dims, n_plan, ag_size):
    """Run the RewardModel forward pass with a single pallas_call."""
    batch, ag_feat = achieved_goal.shape
    plan_feat = plan.shape[1]
    L, max_in, max_out = w_packed.shape

    tile_b = _pick_batch_tile(batch)
    grid = (batch // tile_b,)

    kernel = functools.partial(_reward_kernel, tuple(dims), n_plan, ag_size)

    flops = 2 * batch * sum(di * do for di, do in dims)
    bytes_accessed = ((achieved_goal.size + plan.size + batch) * 4
                      + w_packed.size * 2 + b_packed.size * 4)

    return pl.pallas_call(
        kernel,
        out_shape=jax.ShapeDtypeStruct((batch, 1), jnp.float32),
        grid=grid,
        in_specs=[
            # Activations: tiled over the batch grid.
            pl.BlockSpec((tile_b, ag_feat), lambda i: (i, 0)),
            pl.BlockSpec((tile_b, plan_feat), lambda i: (i, 0)),
            # Packed parameters: constant block index -> stay resident in VMEM
            # across all batch tiles.
            pl.BlockSpec((L, max_in, max_out), lambda i: (0, 0, 0)),
            pl.BlockSpec((L, 1, max_out), lambda i: (0, 0, 0)),
        ],
        out_specs=pl.BlockSpec((tile_b, 1), lambda i: (i, 0)),
        compiler_params=pltpu.CompilerParams(
            dimension_semantics=("parallel",)),
        cost_estimate=pl.CostEstimate(
            flops=flops, transcendentals=0, bytes_accessed=bytes_accessed),
    )(achieved_goal, plan, w_packed, b_packed)


# ---------------------------------------------------------------------------
# Deterministic parameter initialization (mirrors nn.Linear shapes)
# ---------------------------------------------------------------------------
def _init_linear(key, fan_in, fan_out):
    """Uniform(-1/sqrt(fan_in), 1/sqrt(fan_in)) like PyTorch's nn.Linear."""
    kw, kb = jax.random.split(key)
    bound = 1.0 / jnp.sqrt(jnp.float32(fan_in))
    w = jax.random.uniform(kw, (fan_in, fan_out), jnp.float32, -bound, bound)
    b = jax.random.uniform(kb, (1, fan_out), jnp.float32, -bound, bound)
    return w, b


def build_layers(key, achieved_goal_size, plan_size, plan_dims, final_dims):
    """Per-layer (w [in,out], b [1,out]) f32 params in PyTorch forward order."""
    layers = []
    din = plan_size
    for dout in plan_dims:                       # plan encoder
        key, sub = jax.random.split(key)
        layers.append(_init_linear(sub, din, dout))
        din = dout
    din = achieved_goal_size + plan_dims[-1]     # final layers
    for dout in final_dims:
        key, sub = jax.random.split(key)
        layers.append(_init_linear(sub, din, dout))
        din = dout
    key, sub = jax.random.split(key)             # output head -> 1
    layers.append(_init_linear(sub, din, 1))
    return layers


def pack_params(layers):
    """Pack all layers into one bf16 weight buffer + one f32 bias buffer.

    Non-head layers are stored as [d_in, d_out]; the head weight is stored
    transposed as a [1, d_last] row so the kernel can do a VPU reduce.
    Zero padding to [L, MAX_IN, MAX_OUT] is harmless (padded rows/cols are
    never read: static slices select exactly the meaningful region).
    """
    stored = [(w, b) for (w, b) in layers[:-1]]
    w_head, b_head = layers[-1]
    stored.append((w_head.T, b_head))            # head as a row

    max_in = max(w.shape[0] for w, _ in stored)
    max_out = max(w.shape[1] for w, _ in stored)
    max_in = ((max_in + 7) // 8) * 8             # sublane multiple
    max_out = ((max_out + 127) // 128) * 128     # lane multiple

    n = len(stored)
    w_packed = jnp.zeros((n, max_in, max_out), jnp.bfloat16)
    b_packed = jnp.zeros((n, 1, max_out), jnp.float32)
    for i, (w, b) in enumerate(stored):
        w_packed = w_packed.at[i, :w.shape[0], :w.shape[1]].set(
            w.astype(jnp.bfloat16))
        b_packed = b_packed.at[i, :, :b.shape[1]].set(b)
    return w_packed, b_packed


def layer_dims(achieved_goal_size, plan_size, plan_dims, final_dims):
    dims = []
    din = plan_size
    for dout in plan_dims:
        dims.append((din, dout))
        din = dout
    din = achieved_goal_size + plan_dims[-1]
    for dout in final_dims:
        dims.append((din, dout))
        din = dout
    dims.append((din, 1))                        # head
    return tuple(dims)


# ---------------------------------------------------------------------------
# Pure-JAX references (mirror the PyTorch forward exactly, incl. concat)
# ---------------------------------------------------------------------------
def reference_forward(achieved_goal, plan, layers, n_plan, quantized):
    """quantized=True mirrors the kernel's bf16-weight / f32-accum numerics."""
    f32 = jnp.float32
    bf16 = jnp.bfloat16

    def mm(x, w):
        if quantized:
            return jnp.dot(x.astype(bf16), w.astype(bf16),
                           preferred_element_type=f32)
        return jnp.dot(x, w, preferred_element_type=f32)

    h = plan
    for w, b in layers[:n_plan]:
        h = jnp.maximum(mm(h, w) + b, 0.0)
    r = jnp.concatenate([achieved_goal, h], axis=-1)
    for w, b in layers[n_plan:-1]:
        r = jnp.maximum(mm(r, w) + b, 0.0)
    w, b = layers[-1]
    if quantized:
        w = w.astype(bf16).astype(f32)           # head runs on f32 VPU in-kernel
    return jnp.dot(r, w, preferred_element_type=f32) + b


# ---------------------------------------------------------------------------
if __name__ == "__main__":
    # Small, forward-consistent shapes.
    batch = 8
    achieved_goal_size = 16
    plan_size = 32
    plan_encoding_layers_dim = [32, 32]
    final_layers_dim = [64, 32]

    key = jax.random.PRNGKey(0)
    k_ag, k_plan, k_params = jax.random.split(key, 3)

    achieved_goal = jax.random.normal(
        k_ag, (batch, achieved_goal_size), jnp.float32)
    plan = jax.random.normal(k_plan, (batch, plan_size), jnp.float32)

    layers = build_layers(k_params, achieved_goal_size, plan_size,
                          plan_encoding_layers_dim, final_layers_dim)
    w_packed, b_packed = pack_params(layers)
    dims = layer_dims(achieved_goal_size, plan_size,
                      plan_encoding_layers_dim, final_layers_dim)
    n_plan = len(plan_encoding_layers_dim)

    out = reward_model_forward(achieved_goal, plan, w_packed, b_packed,
                               dims, n_plan, achieved_goal_size)
    out = jax.block_until_ready(out)

    # Tight check vs a reference using the same bf16 weights / f32 accumulation.
    ref_q = reference_forward(achieved_goal, plan, layers, n_plan,
                              quantized=True)
    # Looser sanity check vs the exact f32 PyTorch-equivalent forward.
    ref_f32 = reference_forward(achieved_goal, plan, layers, n_plan,
                                quantized=False)

    assert out.shape == (batch, 1)
    assert jnp.allclose(out, ref_q, atol=5e-3, rtol=5e-3), \
        "mismatch vs bf16-weight reference"
    assert jnp.allclose(out, ref_f32, atol=5e-2, rtol=5e-2), \
        "mismatch vs f32 reference"

    print("KERNEL_OK")
</pallas_src>

<mosaic_0001>
module attributes {stable_mosaic.version = 11 : i64} {
  func.func @_reward_kernel(%arg0: i32, %arg1: memref<8x16xf32, #tpu.memory_space<vmem>>, %arg2: memref<8x32xf32, #tpu.memory_space<vmem>>, %arg3: memref<5x64x128xbf16, #tpu.memory_space<vmem>>, %arg4: memref<5x1x128xf32, #tpu.memory_space<vmem>>, %arg5: memref<8x1xf32, #tpu.memory_space<vmem>>) attributes {dimension_semantics = [#tpu.dimension_semantics<parallel>], iteration_bounds = array<i64: 1>, scalar_prefetch = 0 : i64, scratch_operands = 0 : i64, tpu.core_type = #tpu.core_type<tc>, window_params = [{transform_indices = @transform_0, window_bounds = array<i64: 8, 16>}, {transform_indices = @transform_1, window_bounds = array<i64: 8, 32>}, {pipeline_mode = #tpu.pipeline_mode<synchronous>, transform_indices = @transform_2, window_bounds = array<i64: 5, 64, 128>}, {pipeline_mode = #tpu.pipeline_mode<synchronous>, transform_indices = @transform_3, window_bounds = array<i64: 5, 1, 128>}, {transform_indices = @transform_4, window_bounds = array<i64: 8, 1>}]} {
    %c0 = arith.constant 0 : index
    %c0_0 = arith.constant 0 : index
    %0 = vector.load %arg2[%c0, %c0_0] : memref<8x32xf32, #tpu.memory_space<vmem>>, vector<8x32xf32>
    %c0_1 = arith.constant 0 : index
    %c0_2 = arith.constant 0 : index
    %c0_3 = arith.constant 0 : index
    %1 = vector.load %arg3[%c0_1, %c0_2, %c0_3] : memref<5x64x128xbf16, #tpu.memory_space<vmem>>, vector<1x64x128xbf16>
    %2 = vector.shape_cast %1 : vector<1x64x128xbf16> to vector<64x128xbf16>
    %3 = vector.extract_strided_slice %2 {offsets = [0, 0], sizes = [32, 32], strides = [1, 1]} : vector<64x128xbf16> to vector<32x32xbf16>
    %c0_4 = arith.constant 0 : index
    %c0_5 = arith.constant 0 : index
    %c0_6 = arith.constant 0 : index
    %4 = vector.load %arg4[%c0_4, %c0_5, %c0_6] : memref<5x1x128xf32, #tpu.memory_space<vmem>>, vector<1x1x128xf32>
    %5 = vector.shape_cast %4 : vector<1x1x128xf32> to vector<1x128xf32>
    %6 = vector.extract_strided_slice %5 {offsets = [0, 0], sizes = [1, 32], strides = [1, 1]} : vector<1x128xf32> to vector<1x32xf32>
    %7 = arith.truncf %0 : vector<8x32xf32> to vector<8x32xbf16>
    %cst = arith.constant dense<0.000000e+00> : vector<8x32xf32>
    %8 = tpu.matmul %7, %3, %cst {dimension_numbers = #tpu.dot_dimension_numbers<[1], [0], [0], [1], [0, 0, 1, 1], [], []>} : vector<8x32xbf16>, vector<32x32xbf16>, vector<8x32xf32> -> vector<8x32xf32>
    %9 = vector.broadcast %6 : vector<1x32xf32> to vector<8x32xf32>
    %10 = arith.addf %8, %9 : vector<8x32xf32>
    %cst_7 = arith.constant 0.000000e+00 : f32
    %11 = vector.broadcast %cst_7 : f32 to vector<8x32xf32>
    %12 = arith.maximumf %10, %11 : vector<8x32xf32>
    %c1 = arith.constant 1 : index
    %c0_8 = arith.constant 0 : index
    %c0_9 = arith.constant 0 : index
    %13 = vector.load %arg3[%c1, %c0_8, %c0_9] : memref<5x64x128xbf16, #tpu.memory_space<vmem>>, vector<1x64x128xbf16>
    %14 = vector.shape_cast %13 : vector<1x64x128xbf16> to vector<64x128xbf16>
    %15 = vector.extract_strided_slice %14 {offsets = [0, 0], sizes = [32, 32], strides = [1, 1]} : vector<64x128xbf16> to vector<32x32xbf16>
    %c1_10 = arith.constant 1 : index
    %c0_11 = arith.constant 0 : index
    %c0_12 = arith.constant 0 : index
    %16 = vector.load %arg4[%c1_10, %c0_11, %c0_12] : memref<5x1x128xf32, #tpu.memory_space<vmem>>, vector<1x1x128xf32>
    %17 = vector.shape_cast %16 : vector<1x1x128xf32> to vector<1x128xf32>
    %18 = vector.extract_strided_slice %17 {offsets = [0, 0], sizes = [1, 32], strides = [1, 1]} : vector<1x128xf32> to vector<1x32xf32>
    %19 = arith.truncf %12 : vector<8x32xf32> to vector<8x32xbf16>
    %cst_13 = arith.constant dense<0.000000e+00> : vector<8x32xf32>
    %20 = tpu.matmul %19, %15, %cst_13 {dimension_numbers = #tpu.dot_dimension_numbers<[1], [0], [0], [1], [0, 0, 1, 1], [], []>} : vector<8x32xbf16>, vector<32x32xbf16>, vector<8x32xf32> -> vector<8x32xf32>
    %21 = vector.broadcast %18 : vector<1x32xf32> to vector<8x32xf32>
    %22 = arith.addf %20, %21 : vector<8x32xf32>
    %cst_14 = arith.constant 0.000000e+00 : f32
    %23 = vector.broadcast %cst_14 : f32 to vector<8x32xf32>
    %24 = arith.maximumf %22, %23 : vector<8x32xf32>
    %c2 = arith.constant 2 : index
    %c0_15 = arith.constant 0 : index
    %c0_16 = arith.constant 0 : index
    %25 = vector.load %arg3[%c2, %c0_15, %c0_16] : memref<5x64x128xbf16, #tpu.memory_space<vmem>>, vector<1x64x128xbf16>
    %26 = vector.shape_cast %25 : vector<1x64x128xbf16> to vector<64x128xbf16>
    %27 = vector.extract_strided_slice %26 {offsets = [0, 0], sizes = [16, 64], strides = [1, 1]} : vector<64x128xbf16> to vector<16x64xbf16>
    %28 = vector.extract_strided_slice %26 {offsets = [16, 0], sizes = [32, 64], strides = [1, 1]} : vector<64x128xbf16> to vector<32x64xbf16>
    %c2_17 = arith.constant 2 : index
    %c0_18 = arith.constant 0 : index
    %c0_19 = arith.constant 0 : index
    %29 = vector.load %arg4[%c2_17, %c0_18, %c0_19] : memref<5x1x128xf32, #tpu.memory_space<vmem>>, vector<1x1x128xf32>
    %30 = vector.shape_cast %29 : vector<1x1x128xf32> to vector<1x128xf32>
    %31 = vector.extract_strided_slice %30 {offsets = [0, 0], sizes = [1, 64], strides = [1, 1]} : vector<1x128xf32> to vector<1x64xf32>
    %c0_20 = arith.constant 0 : index
    %c0_21 = arith.constant 0 : index
    %32 = vector.load %arg1[%c0_20, %c0_21] : memref<8x16xf32, #tpu.memory_space<vmem>>, vector<8x16xf32>
    %33 = arith.truncf %32 : vector<8x16xf32> to vector<8x16xbf16>
    %cst_22 = arith.constant dense<0.000000e+00> : vector<8x64xf32>
    %34 = tpu.matmul %33, %27, %cst_22 {dimension_numbers = #tpu.dot_dimension_numbers<[1], [0], [0], [1], [0, 0, 1, 1], [], []>} : vector<8x16xbf16>, vector<16x64xbf16>, vector<8x64xf32> -> vector<8x64xf32>
    %35 = arith.truncf %24 : vector<8x32xf32> to vector<8x32xbf16>
    %cst_23 = arith.constant dense<0.000000e+00> : vector<8x64xf32>
    %36 = tpu.matmul %35, %28, %cst_23 {dimension_numbers = #tpu.dot_dimension_numbers<[1], [0], [0], [1], [0, 0, 1, 1], [], []>} : vector<8x32xbf16>, vector<32x64xbf16>, vector<8x64xf32> -> vector<8x64xf32>
    %37 = arith.addf %34, %36 : vector<8x64xf32>
    %38 = vector.broadcast %31 : vector<1x64xf32> to vector<8x64xf32>
    %39 = arith.addf %37, %38 : vector<8x64xf32>
    %cst_24 = arith.constant 0.000000e+00 : f32
    %40 = vector.broadcast %cst_24 : f32 to vector<8x64xf32>
    %41 = arith.maximumf %39, %40 : vector<8x64xf32>
    %c3 = arith.constant 3 : index
    %c0_25 = arith.constant 0 : index
    %c0_26 = arith.constant 0 : index
    %42 = vector.load %arg3[%c3, %c0_25, %c0_26] : memref<5x64x128xbf16, #tpu.memory_space<vmem>>, vector<1x64x128xbf16>
    %43 = vector.shape_cast %42 : vector<1x64x128xbf16> to vector<64x128xbf16>
    %44 = vector.extract_strided_slice %43 {offsets = [0, 0], sizes = [64, 32], strides = [1, 1]} : vector<64x128xbf16> to vector<64x32xbf16>
    %c3_27 = arith.constant 3 : index
    %c0_28 = arith.constant 0 : index
    %c0_29 = arith.constant 0 : index
    %45 = vector.load %arg4[%c3_27, %c0_28, %c0_29] : memref<5x1x128xf32, #tpu.memory_space<vmem>>, vector<1x1x128xf32>
    %46 = vector.shape_cast %45 : vector<1x1x128xf32> to vector<1x128xf32>
    %47 = vector.extract_strided_slice %46 {offsets = [0, 0], sizes = [1, 32], strides = [1, 1]} : vector<1x128xf32> to vector<1x32xf32>
    %48 = arith.truncf %41 : vector<8x64xf32> to vector<8x64xbf16>
    %cst_30 = arith.constant dense<0.000000e+00> : vector<8x32xf32>
    %49 = tpu.matmul %48, %44, %cst_30 {dimension_numbers = #tpu.dot_dimension_numbers<[1], [0], [0], [1], [0, 0, 1, 1], [], []>} : vector<8x64xbf16>, vector<64x32xbf16>, vector<8x32xf32> -> vector<8x32xf32>
    %50 = vector.broadcast %47 : vector<1x32xf32> to vector<8x32xf32>
    %51 = arith.addf %49, %50 : vector<8x32xf32>
    %cst_31 = arith.constant 0.000000e+00 : f32
    %52 = vector.broadcast %cst_31 : f32 to vector<8x32xf32>
    %53 = arith.maximumf %51, %52 : vector<8x32xf32>
    %c4 = arith.constant 4 : index
    %c0_32 = arith.constant 0 : index
    %c0_33 = arith.constant 0 : index
    %54 = vector.load %arg3[%c4, %c0_32, %c0_33] : memref<5x64x128xbf16, #tpu.memory_space<vmem>>, vector<1x64x128xbf16>
    %55 = vector.shape_cast %54 : vector<1x64x128xbf16> to vector<64x128xbf16>
    %56 = vector.extract_strided_slice %55 {offsets = [0, 0], sizes = [1, 32], strides = [1, 1]} : vector<64x128xbf16> to vector<1x32xbf16>
    %57 = arith.extf %56 : vector<1x32xbf16> to vector<1x32xf32>
    %c4_34 = arith.constant 4 : index
    %c0_35 = arith.constant 0 : index
    %c0_36 = arith.constant 0 : index
    %58 = vector.load %arg4[%c4_34, %c0_35, %c0_36] : memref<5x1x128xf32, #tpu.memory_space<vmem>>, vector<1x1x128xf32>
    %59 = vector.shape_cast %58 : vector<1x1x128xf32> to vector<1x128xf32>
    %60 = vector.extract_strided_slice %59 {offsets = [0, 0], sizes = [1, 1], strides = [1, 1]} : vector<1x128xf32> to vector<1x1xf32>
    %61 = vector.broadcast %57 : vector<1x32xf32> to vector<8x32xf32>
    %62 = arith.mulf %53, %61 : vector<8x32xf32>
    %cst_37 = arith.constant dense<0.000000e+00> : vector<8xf32>
    %63 = vector.multi_reduction <add>, %62, %cst_37 [1] : vector<8x32xf32> to vector<8xf32>
    %64 = vector.shape_cast %63 : vector<8xf32> to vector<8x1xf32>
    %65 = vector.broadcast %60 : vector<1x1xf32> to vector<8x1xf32>
    %66 = arith.addf %64, %65 : vector<8x1xf32>
    %c0_38 = arith.constant 0 : index
    %c0_39 = arith.constant 0 : index
    %67 = vector.load %arg5[%c0_38, %c0_39] : memref<8x1xf32, #tpu.memory_space<vmem>>, vector<8x1xf32>
    tpu.vector_store %arg5[%c0_38, %c0_39], %66 {strides = array<i32>} : memref<8x1xf32, #tpu.memory_space<vmem>>, vector<8x1xf32>,
    return
  }
  func.func @transform_0(%arg0: i32) -> (i32, i32) {
    %c0_i32 = arith.constant 0 : i32
    %c0_i32_0 = arith.constant 0 : i32
    return %arg0, %c0_i32 : i32, i32
  }
  func.func @transform_1(%arg0: i32) -> (i32, i32) {
    %c0_i32 = arith.constant 0 : i32
    %c0_i32_0 = arith.constant 0 : i32
    return %arg0, %c0_i32 : i32, i32
  }
  func.func @transform_2(%arg0: i32) -> (i32, i32, i32) {
    %c0_i32 = arith.constant 0 : i32
    %c0_i32_0 = arith.constant 0 : i32
    %c0_i32_1 = arith.constant 0 : i32
    %c0_i32_2 = arith.constant 0 : i32
    return %c0_i32, %c0_i32_0, %c0_i32_1 : i32, i32, i32
  }
  func.func @transform_3(%arg0: i32) -> (i32, i32, i32) {
    %c0_i32 = arith.constant 0 : i32
    %c0_i32_0 = arith.constant 0 : i32
    %c0_i32_1 = arith.constant 0 : i32
    %c0_i32_2 = arith.constant 0 : i32
    return %c0_i32, %c0_i32_0, %c0_i32_1 : i32, i32, i32
  }
  func.func @transform_4(%arg0: i32) -> (i32, i32) {
    %c0_i32 = arith.constant 0 : i32
    %c0_i32_0 = arith.constant 0 : i32
    return %arg0, %c0_i32 : i32, i32
  }
}

</mosaic_0001>

<llo_original>
// kernel: tpu_custom_call.1
$region0: #{tpu_custom_call.1}
  #allocation0 [shape = 'u32[]', space=smem, size = 0x4, offset = 0x4, fixed_abs, tag = 'smem constant byte address 0x4 - core index']
  #allocation1 [shape = 'u32[144,128]{1,0:T(1,128)}', space=vmem, size = 0x12000, scoped, tag = 'internal scratch']
  %s0 = inlined_call_operand.hbm [shape: f32[8,16], index: 0, kind: input, shape index: {}]
  %s1 = inlined_call_operand.hbm [shape: f32[8,32], index: 1, kind: input, shape index: {}]
  %s2 = inlined_call_operand.hbm [shape: bf16[5,64,128], index: 2, kind: input, shape index: {}]
  %s3 = inlined_call_operand.vmem [shape: f32[5,1,128], index: 3, kind: input, shape index: {}]
  %s4 = inlined_call_operand.vmem [shape: f32[8,1], index: 4, kind: output, shape index: {}]
  %s5 = sld [smem:[#allocation0]]
  $region38: #{tpu_custom_call.1} parent=0
    _
  %s7 = ssub.s32 1, %s5
  %s8 = scalar_select 0, %s7, %s5
  $region1: #{tpu_custom_call.1} parent=0
    #allocation2 [shape = 'u8[4096]{0}', space=vmem, size = 0x1000, scoped, tag = 'input window, operand 0, single buffered']
    #allocation3 [shape = 's32[1]{0}', space=sflag, size = 0x4, scoped, tag = 'scoped memory for tpu_custom_call.1']
    #allocation4 [shape = 'u8[4096]{0}', space=vmem, size = 0x1000, scoped, tag = 'input window, operand 1, single buffered']
    #allocation5 [shape = 's32[1]{0}', space=sflag, size = 0x4, scoped, tag = 'scoped memory for tpu_custom_call.1']
    #allocation6 [shape = 'u8[81920]{0}', space=vmem, size = 0x14000, scoped, tag = 'input window, operand 2, single buffered']
    %9 = vsyncpa [#allocation3], 0
    %10 = vsyncpa [#allocation5], 0
    // Predicated region
    $region2: #{tpu_custom_call.1} parent=1 // pred_check
      _
    $region3: #{tpu_custom_call.1} parent=1 // pred_check_branch
      %12 = sbr.rel (0) target = $region5
    $region4: #{tpu_custom_call.1} parent=1 // pred_region
      %s14 = ssub.s32 128, 128
      %15 = vsyncadd [#allocation3], %s14
      %s17 = sshll.u32 [#allocation2], 4
      %s18 = int_to_ptr.vmem [resolvable:$true] %s17
      %20 = dma.hbm_to_vmem [thread:$0]  %s0, 128, %s18, [#allocation3]
    $region5: #{tpu_custom_call.1} parent=1 // pred_fallthru
      _
    // Predicated region
    $region6: #{tpu_custom_call.1} parent=1 // pred_check
      _
    $region7: #{tpu_custom_call.1} parent=1 // pred_check_branch
      %22 = sbr.rel (0) target = $region9
    $region8: #{tpu_custom_call.1} parent=1 // pred_region
      %s24 = ssub.s32 128, 128
      %25 = vsyncadd [#allocation5], %s24
      %s27 = sshll.u32 [#allocation4], 4
      %s28 = int_to_ptr.vmem [resolvable:$true] %s27
      %30 = dma.hbm_to_vmem [thread:$0]  %s1, 128, %s28, [#allocation5]
    $region9: #{tpu_custom_call.1} parent=1 // pred_fallthru
      _
    // Predicated region
    $region10: #{tpu_custom_call.1} parent=1 // pred_check
      _
    $region11: #{tpu_custom_call.1} parent=1 // pred_check_branch
      %32 = sbr.rel (0) target = $region13
    $region12: #{tpu_custom_call.1} parent=1 // pred_region
      %s34 = ssub.s32 2560, 2560
      %35 = vsyncadd [#allocation5], %s34
      %s36 = sshll.u32 [#allocation6], 4
      %s37 = int_to_ptr.vmem [resolvable:$true] %s36
      %42 = dma.hbm_to_vmem [thread:$0]  %s2, 2560, %s37, [#allocation5], 64, 64, 4
    $region13: #{tpu_custom_call.1} parent=1 // pred_fallthru
      _
    // Predicated region
    $region14: #{tpu_custom_call.1} parent=1 // pred_check
      _
    $region15: #{tpu_custom_call.1} parent=1 // pred_check_branch
      %44 = sbr.rel (0) target = $region17
    $region16: #{tpu_custom_call.1} parent=1 // pred_region
      _
    $region17: #{tpu_custom_call.1} parent=1 // pred_fallthru
      _
    // Predicated region
    $region18: #{tpu_custom_call.1} parent=1 // pred_check
      _
    $region19: #{tpu_custom_call.1} parent=1 // pred_check_branch
      %46 = sbr.rel (0) target = $region21
    $region20: #{tpu_custom_call.1} parent=1 // pred_region
      %47 = dma.done [#allocation3], 128
    $region21: #{tpu_custom_call.1} parent=1 // pred_fallthru
      _
    // Predicated region
    $region22: #{tpu_custom_call.1} parent=1 // pred_check
      _
    $region23: #{tpu_custom_call.1} parent=1 // pred_check_branch
      %49 = sbr.rel (0) target = $region25
    $region24: #{tpu_custom_call.1} parent=1 // pred_region
      %50 = dma.done [#allocation5], 128
    $region25: #{tpu_custom_call.1} parent=1 // pred_fallthru
      _
    // Predicated region
    $region26: #{tpu_custom_call.1} parent=1 // pred_check
      _
    $region27: #{tpu_custom_call.1} parent=1 // pred_check_branch
      %52 = sbr.rel (0) target = $region29
    $region28: #{tpu_custom_call.1} parent=1 // pred_region
      %53 = dma.done [#allocation5], 2560
    $region29: #{tpu_custom_call.1} parent=1 // pred_fallthru
      _
    %v55 = vld [vmem:[#allocation4] sm:$0xff]
    %v56 = vld [vmem:[#allocation6] sm:$0xf]
    %v57 = vld [vmem:[#allocation6 + $0x4] sm:$0xf]
    %v58 = vld [vmem:[#allocation6 + $0x8] sm:$0xf]
    %v59 = vld [vmem:[#allocation6 + $0xc] sm:$0xf]
    %v60 = vld [vmem:[%s3] sm:$0x1]
    %v61 = vpack.c.bf16 %v55, %v55
    %v63 = vlaneseq
    %v64 = vshrl.u32 %v63, 7
    %v65 = vsub.s32 0, %v64
    %v66 = vrot.slane %v60, %v65
    %v72 = vunpack.c.l.b16 %v56
    %v73 = vunpack.c.l.b16 %v57
    %v74 = vunpack.c.l.b16 %v58
    %v75 = vunpack.c.l.b16 %v59
    %v76 = vpack.c.b16 %v73, %v72
    %v77 = vpack.c.b16 %v75, %v74
    %vm80 = vcmask 261120
    %v82 = vsel %vm80, %v61, 0
    %84 = vmatprep.subr.bf16.mxu0 0
    %85 = vmatpush1.bf16.msra.mxu0 %v76
    %86 = vmatprep.subr.bf16.mxu0 0
    %87 = vmatpush1.bf16.msra.mxu0 %v77
    %88 = vmatprep.subr.bf16.mxu0 0
    %89 = vmatpush1.bf16.msra.mxu0 0
    %90 = vmatprep.subr.bf16.mxu0 0
    %91 = vmatpush1.bf16.msra.mxu0 0
    %92 = vmatprep.subr.bf16.mxu0 0
    %93 = vmatpush1.bf16.msra.mxu0 0
    %94 = vmatprep.subr.bf16.mxu0 0
    %95 = vmatpush1.bf16.msra.mxu0 0
    %96 = vmatprep.subr.bf16.mxu0 0
    %97 = vmatpush1.bf16.msra.mxu0 0
    %98 = vmatprep.subr.bf16.mxu0 0
    %99 = vmatpush1.bf16.msra.mxu0 0
    %100 = vmatprep.subr.bf16.mxu0 0
    %101 = vmatpush1.bf16.msra.mxu0 0
    %102 = vmatprep.subr.bf16.mxu0 0
    %103 = vmatpush1.bf16.msra.mxu0 0
    %104 = vmatprep.subr.bf16.mxu0 0
    %105 = vmatpush1.bf16.msra.mxu0 0
    %106 = vmatprep.subr.bf16.mxu0 0
    %107 = vmatpush1.bf16.msra.mxu0 0
    %108 = vmatprep.subr.bf16.mxu0 0
    %109 = vmatpush1.bf16.msra.mxu0 0
    %110 = vmatprep.subr.bf16.mxu0 0
    %111 = vmatpush1.bf16.msra.mxu0 0
    %112 = vmatprep.subr.bf16.mxu0 0
    %113 = vmatpush1.bf16.msra.mxu0 0
    %114 = vmatprep.subr.bf16.mxu0 0
    %115 = vmatpush1.bf16.msra.mxu0 0
    %116 = vmatprep.mubr.bf16.mxu0 0
    %117 = vmatmul.mubr.bf16.gmra.mrb[0].mxu0 %v82
    %v118 = vpop.f32.mrb[0].mxu0
    %v119 = vadd.f32 %v66, %v118
    %v120 = vpop.f32.mrb[0].mxu0
    %v121 = vpop.f32.mrb[0].mxu0
    %v122 = vpop.f32.mrb[0].mxu0
    %123 = vdwg.mxu0
    %v124 = vmax.f32 %v119, 0.0
    %s125 = scalar_lea.vmem [#allocation6], 32
    %v126 = vld [vmem:[%s125] sm:$0xf]
    %v127 = vld [vmem:[%s125 + $0x4] sm:$0xf]
    %v128 = vld [vmem:[%s125 + $0x8] sm:$0xf]
    %v129 = vld [vmem:[%s125 + $0xc] sm:$0xf]
    %s130 = scalar_lea.vmem %s3, 1
    %v131 = vld [vmem:[%s130] sm:$0x1]
    %v132 = vpack.c.bf16 %v124, %v124
    %v134 = vlaneseq
    %v135 = vshrl.u32 %v134, 7
    %v136 = vsub.s32 0, %v135
    %v137 = vrot.slane %v131, %v136
    %v143 = vunpack.c.l.b16 %v126
    %v144 = vunpack.c.l.b16 %v127
    %v145 = vunpack.c.l.b16 %v128
    %v146 = vunpack.c.l.b16 %v129
    %v147 = vpack.c.b16 %v144, %v143
    %v148 = vpack.c.b16 %v146, %v145
    %v152 = vsel %vm80, %v132, 0
    %154 = vmatprep.subr.bf16.mxu0 0
    %155 = vmatpush1.bf16.msra.mxu0 %v147
    %156 = vmatprep.subr.bf16.mxu0 0
    %157 = vmatpush1.bf16.msra.mxu0 %v148
    %158 = vmatprep.subr.bf16.mxu0 0
    %159 = vmatpush1.bf16.msra.mxu0 0
    %160 = vmatprep.subr.bf16.mxu0 0
    %161 = vmatpush1.bf16.msra.mxu0 0
    %162 = vmatprep.subr.bf16.mxu0 0
    %163 = vmatpush1.bf16.msra.mxu0 0
    %164 = vmatprep.subr.bf16.mxu0 0
    %165 = vmatpush1.bf16.msra.mxu0 0
    %166 = vmatprep.subr.bf16.mxu0 0
    %167 = vmatpush1.bf16.msra.mxu0 0
    %168 = vmatprep.subr.bf16.mxu0 0
    %169 = vmatpush1.bf16.msra.mxu0 0
    %170 = vmatprep.subr.bf16.mxu0 0
    %171 = vmatpush1.bf16.msra.mxu0 0
    %172 = vmatprep.subr.bf16.mxu0 0
    %173 = vmatpush1.bf16.msra.mxu0 0
    %174 = vmatprep.subr.bf16.mxu0 0
    %175 = vmatpush1.bf16.msra.mxu0 0
    %176 = vmatprep.subr.bf16.mxu0 0
    %177 = vmatpush1.bf16.msra.mxu0 0
    %178 = vmatprep.subr.bf16.mxu0 0
    %179 = vmatpush1.bf16.msra.mxu0 0
    %180 = vmatprep.subr.bf16.mxu0 0
    %181 = vmatpush1.bf16.msra.mxu0 0
    %182 = vmatprep.subr.bf16.mxu0 0
    %183 = vmatpush1.bf16.msra.mxu0 0
    %184 = vmatprep.subr.bf16.mxu0 0
    %185 = vmatpush1.bf16.msra.mxu0 0
    %186 = vmatprep.mubr.bf16.mxu0 0
    %187 = vmatmul.mubr.bf16.gmra.mrb[0].mxu0 %v152
    %v188 = vpop.f32.mrb[0].mxu0
    %v189 = vadd.f32 %v137, %v188
    %v190 = vpop.f32.mrb[0].mxu0
    %v191 = vpop.f32.mrb[0].mxu0
    %v192 = vpop.f32.mrb[0].mxu0
    %193 = vdwg.mxu0
    %v194 = vmax.f32 %v189, 0.0
    %s195 = scalar_lea.vmem [#allocation6], 64
    %v196 = vld [vmem:[%s195] sm:$0xf]
    %v197 = vld [vmem:[%s195 + $0x4] sm:$0xf]
    %v198 = vld [vmem:[%s195 + $0x8] sm:$0xf]
    %v199 = vld [vmem:[%s195 + $0xc] sm:$0xf]
    %v200 = vld [vmem:[%s195 + $0x10] sm:$0xf]
    %v201 = vld [vmem:[%s195 + $0x14] sm:$0xf]
    %s202 = scalar_lea.vmem %s3, 2
    %v203 = vld [vmem:[%s202] sm:$0x1]
    %v204 = vld [vmem:[#allocation2] sm:$0xff]
    %v205 = vpack.c.bf16 %v204, %v204
    %v206 = vpack.c.bf16 %v194, %v194
    %v211 = vunpack.c.l.b16 %v198
    %v212 = vunpack.c.l.b16 %v199
    %v213 = vunpack.c.l.b16 %v200
    %v214 = vunpack.c.l.b16 %v201
    %v215 = vpack.c.b16 %v212, %v211
    %v216 = vpack.c.b16 %v214, %v213
    %v220 = vsel %vm80, %v206, 0
    %222 = vmatprep.subr.bf16.mxu0 0
    %223 = vmatpush1.bf16.msra.mxu0 %v215
    %224 = vmatprep.subr.bf16.mxu0 0
    %225 = vmatpush1.bf16.msra.mxu0 %v216
    %226 = vmatprep.subr.bf16.mxu0 0
    %227 = vmatpush1.bf16.msra.mxu0 0
    %228 = vmatprep.subr.bf16.mxu0 0
    %229 = vmatpush1.bf16.msra.mxu0 0
    %230 = vmatprep.subr.bf16.mxu0 0
    %231 = vmatpush1.bf16.msra.mxu0 0
    %232 = vmatprep.subr.bf16.mxu0 0
    %233 = vmatpush1.bf16.msra.mxu0 0
    %234 = vmatprep.subr.bf16.mxu0 0
    %235 = vmatpush1.bf16.msra.mxu0 0
    %236 = vmatprep.subr.bf16.mxu0 0
    %237 = vmatpush1.bf16.msra.mxu0 0
    %238 = vmatprep.subr.bf16.mxu0 0
    %239 = vmatpush1.bf16.msra.mxu0 0
    %240 = vmatprep.subr.bf16.mxu0 0
    %241 = vmatpush1.bf16.msra.mxu0 0
    %242 = vmatprep.subr.bf16.mxu0 0
    %243 = vmatpush1.bf16.msra.mxu0 0
    %244 = vmatprep.subr.bf16.mxu0 0
    %245 = vmatpush1.bf16.msra.mxu0 0
    %246 = vmatprep.subr.bf16.mxu0 0
    %247 = vmatpush1.bf16.msra.mxu0 0
    %248 = vmatprep.subr.bf16.mxu0 0
    %249 = vmatpush1.bf16.msra.mxu0 0
    %250 = vmatprep.subr.bf16.mxu0 0
    %251 = vmatpush1.bf16.msra.mxu0 0
    %252 = vmatprep.subr.bf16.mxu0 0
    %253 = vmatpush1.bf16.msra.mxu0 0
    %254 = vmatprep.mubr.bf16.mxu0 0
    %255 = vmatmul.mubr.bf16.gmra.mrb[0].mxu0 %v220
    %v256 = vpop.f32.mrb[0].mxu0
    %v257 = vadd.f32 0.0, %v256
    %v258 = vpop.f32.mrb[0].mxu0
    %v259 = vpop.f32.mrb[0].mxu0
    %v260 = vpop.f32.mrb[0].mxu0
    %261 = vdwg.mxu0
    %v264 = vunpack.c.l.b16 %v196
    %v265 = vunpack.c.l.b16 %v197
    %v266 = vpack.c.b16 %v265, %v264
    %vm268 = vcmask 130048
    %v270 = vsel %vm268, %v205, 0
    %272 = vmatprep.subr.bf16.mxu0 0
    %273 = vmatpush1.bf16.msra.mxu0 %v266
    %274 = vmatprep.subr.bf16.mxu0 0
    %275 = vmatpush1.bf16.msra.mxu0 0
    %276 = vmatprep.subr.bf16.mxu0 0
    %277 = vmatpush1.bf16.msra.mxu0 0
    %278 = vmatprep.subr.bf16.mxu0 0
    %279 = vmatpush1.bf16.msra.mxu0 0
    %280 = vmatprep.subr.bf16.mxu0 0
    %281 = vmatpush1.bf16.msra.mxu0 0
    %282 = vmatprep.subr.bf16.mxu0 0
    %283 = vmatpush1.bf16.msra.mxu0 0
    %284 = vmatprep.subr.bf16.mxu0 0
    %285 = vmatpush1.bf16.msra.mxu0 0
    %286 = vmatprep.subr.bf16.mxu0 0
    %287 = vmatpush1.bf16.msra.mxu0 0
    %288 = vmatprep.subr.bf16.mxu0 0
    %289 = vmatpush1.bf16.msra.mxu0 0
    %290 = vmatprep.subr.bf16.mxu0 0
    %291 = vmatpush1.bf16.msra.mxu0 0
    %292 = vmatprep.subr.bf16.mxu0 0
    %293 = vmatpush1.bf16.msra.mxu0 0
    %294 = vmatprep.subr.bf16.mxu0 0
    %295 = vmatpush1.bf16.msra.mxu0 0
    %296 = vmatprep.subr.bf16.mxu0 0
    %297 = vmatpush1.bf16.msra.mxu0 0
    %298 = vmatprep.subr.bf16.mxu0 0
    %299 = vmatpush1.bf16.msra.mxu0 0
    %300 = vmatprep.subr.bf16.mxu0 0
    %301 = vmatpush1.bf16.msra.mxu0 0
    %302 = vmatprep.subr.bf16.mxu0 0
    %303 = vmatpush1.bf16.msra.mxu0 0
    %304 = vmatprep.mubr.bf16.mxu0 0
    %305 = vmatmul.mubr.bf16.gmra.mrb[0].mxu0 %v270
    %v306 = vpop.f32.mrb[0].mxu0
    %v307 = vadd.f32 %v257, %v306
    %v308 = vpop.f32.mrb[0].mxu0
    %v309 = vpop.f32.mrb[0].mxu0
    %v310 = vpop.f32.mrb[0].mxu0
    %311 = vdwg.mxu0
    %v313 = vlaneseq
    %v314 = vshrl.u32 %v313, 7
    %v315 = vsub.s32 0, %v314
    %v316 = vrot.slane %v203, %v315
    %v318 = vadd.f32 %v307, %v316
    %v319 = vmax.f32 %v318, 0.0
    %s320 = scalar_lea.vmem [#allocation6], 96
    %v321 = vld [vmem:[%s320] sm:$0xf]
    %v322 = vld [vmem:[%s320 + $0x4] sm:$0xf]
    %v323 = vld [vmem:[%s320 + $0x8] sm:$0xf]
    %v324 = vld [vmem:[%s320 + $0xc] sm:$0xf]
    %v325 = vld [vmem:[%s320 + $0x10] sm:$0xf]
    %v326 = vld [vmem:[%s320 + $0x14] sm:$0xf]
    %v327 = vld [vmem:[%s320 + $0x18] sm:$0xf]
    %v328 = vld [vmem:[%s320 + $0x1c] sm:$0xf]
    %s329 = scalar_lea.vmem %s3, 3
    %v330 = vld [vmem:[%s329] sm:$0x1]
    %v331 = vpack.c.bf16 %v319, %v319
    %v333 = vlaneseq
    %v334 = vshrl.u32 %v333, 7
    %v335 = vsub.s32 0, %v334
    %v336 = vrot.slane %v330, %v335
    %v346 = vunpack.c.l.b16 %v321
    %v347 = vunpack.c.l.b16 %v322
    %v348 = vunpack.c.l.b16 %v323
    %v349 = vunpack.c.l.b16 %v324
    %v350 = vunpack.c.l.b16 %v325
    %v351 = vunpack.c.l.b16 %v326
    %v352 = vunpack.c.l.b16 %v327
    %v353 = vunpack.c.l.b16 %v328
    %v354 = vpack.c.b16 %v347, %v346
    %v355 = vpack.c.b16 %v349, %v348
    %v356 = vpack.c.b16 %v351, %v350
    %v357 = vpack.c.b16 %v353, %v352
    %vm362 = vcmask 523264
    %v364 = vsel %vm362, %v331, 0
    %366 = vmatprep.subr.bf16.mxu0 0
    %367 = vmatpush1.bf16.msra.mxu0 %v354
    %368 = vmatprep.subr.bf16.mxu0 0
    %369 = vmatpush1.bf16.msra.mxu0 %v355
    %370 = vmatprep.subr.bf16.mxu0 0
    %371 = vmatpush1.bf16.msra.mxu0 %v356
    %372 = vmatprep.subr.bf16.mxu0 0
    %373 = vmatpush1.bf16.msra.mxu0 %v357
    %374 = vmatprep.subr.bf16.mxu0 0
    %375 = vmatpush1.bf16.msra.mxu0 0
    %376 = vmatprep.subr.bf16.mxu0 0
    %377 = vmatpush1.bf16.msra.mxu0 0
    %378 = vmatprep.subr.bf16.mxu0 0
    %379 = vmatpush1.bf16.msra.mxu0 0
    %380 = vmatprep.subr.bf16.mxu0 0
    %381 = vmatpush1.bf16.msra.mxu0 0
    %382 = vmatprep.subr.bf16.mxu0 0
    %383 = vmatpush1.bf16.msra.mxu0 0
    %384 = vmatprep.subr.bf16.mxu0 0
    %385 = vmatpush1.bf16.msra.mxu0 0
    %386 = vmatprep.subr.bf16.mxu0 0
    %387 = vmatpush1.bf16.msra.mxu0 0
    %388 = vmatprep.subr.bf16.mxu0 0
    %389 = vmatpush1.bf16.msra.mxu0 0
    %390 = vmatprep.subr.bf16.mxu0 0
    %391 = vmatpush1.bf16.msra.mxu0 0
    %392 = vmatprep.subr.bf16.mxu0 0
    %393 = vmatpush1.bf16.msra.mxu0 0
    %394 = vmatprep.subr.bf16.mxu0 0
    %395 = vmatpush1.bf16.msra.mxu0 0
    %396 = vmatprep.subr.bf16.mxu0 0
    %397 = vmatpush1.bf16.msra.mxu0 0
    %398 = vmatprep.mubr.bf16.mxu0 0
    %399 = vmatmul.mubr.bf16.gmra.mrb[0].mxu0 %v364
    %v400 = vpop.f32.mrb[0].mxu0
    %v401 = vadd.f32 %v336, %v400
    %v402 = vpop.f32.mrb[0].mxu0
    %v403 = vpop.f32.mrb[0].mxu0
    %v404 = vpop.f32.mrb[0].mxu0
    %405 = vdwg.mxu0
    %v406 = vmax.f32 %v401, 0.0
    %s407 = scalar_lea.vmem [#allocation6], 128
    %v408 = vld [vmem:[%s407] sm:$0xf]
    %v409 = vunpack.c.l.bf16 %v408
    %s410 = scalar_lea.vmem %s3, 4
    %v411 = vld [vmem:[%s410] sm:$0x1]
    %v412 = vlaneseq
    %v413 = vshrl.u32 %v412, 7
    %v414 = vsub.s32 0, %v413
    %v415 = vrot.slane %v409, %v414
    %v416 = vmul.f32 %v406, %v415
    %v417 = vsel %vm80, %v416, 0.0
    %418 = vadd.xlane.f32.xlu0 %v417
    %v419 = vpop.xlane.xlu0 %418
    %v421 = vlaneseq
    %v422 = vshrl.u32 %v421, 7
    %v423 = vsub.s32 0, %v422
    %v424 = vrot.slane %v411, %v423
    %v426 = vadd.f32 %v419, %v424
    %vm427 = vcmask 7168
    %428 = vst.msk [vmem:[%s4] sm:$0xff] %vm427, %v426
    // Predicated region
    $region30: #{tpu_custom_call.1} parent=1 // pred_check
      _
    $region31: #{tpu_custom_call.1} parent=1 // pred_check_branch
      %430 = sbr.rel (0) target = $region33
    $region32: #{tpu_custom_call.1} parent=1 // pred_region
      _
    $region33: #{tpu_custom_call.1} parent=1 // pred_fallthru
      _
    // Predicated region
    $region34: #{tpu_custom_call.1} parent=1 // pred_check
      _
    $region35: #{tpu_custom_call.1} parent=1 // pred_check_branch
      %432 = sbr.rel (0) target = $region37
    $region36: #{tpu_custom_call.1} parent=1 // pred_region
      _
    $region37: #{tpu_custom_call.1} parent=1 // pred_fallthru
      _
    %433 = vsyncpa [#allocation3], 1
    %434 = vsyncpa [#allocation5], 1

</llo_original>
